<compile_context>
chip_gen: v7x
topology: tpu7x:2x2x1
jax: 0.10.0
libtpu: 0.0.40
codegen_flags: <defaults>
</compile_context>

<pallas_src>
import functools

import jax
import jax.numpy as jnp
from jax import lax
from jax.experimental import pallas as pl
from jax.experimental.pallas import tpu as pltpu

# murmur3-style mixing constants, expressed as wrapped int32 literals.
_MIX_SEED = -1640531527   # 0x9E3779B9
_MIX_C1 = -2048144789     # 0x85EBCA6B
_MIX_C2 = -1028477387     # 0xC2B2AE35


def _linear_dropout_stats_kernel(scalars_ref, x_ref, w_ref, params_ref,
                                 y_ref, sum_ref, sumsq_ref, *,
                                 p_dropout, apply_dropout, tile_b, cp):
    i = pl.program_id(0)

    @pl.when(i == 0)
    def _():
        sum_ref[...] = jnp.zeros_like(sum_ref)
        sumsq_ref[...] = jnp.zeros_like(sumsq_ref)

    # ---- Linear on the MXU: bf16 operands, f32 accumulation ----
    bias = params_ref[0:1, :]                                   # (1, cp) f32
    y = jnp.dot(x_ref[...], w_ref[...],
                preferred_element_type=jnp.float32) + bias      # (tile_b, cp)

    row = lax.broadcasted_iota(jnp.int32, (tile_b, cp), 0)
    col = lax.broadcasted_iota(jnp.int32, (tile_b, cp), 1)

    # ---- Dropout (train mode): per-element integer hash, integer threshold ----
    if apply_dropout and p_dropout > 0.0:
        seed = scalars_ref[0]
        gid = (i * tile_b + row) * cp + col + seed * jnp.int32(_MIX_SEED)
        h = gid.astype(jnp.uint32)
        h = (h ^ (h >> jnp.uint32(16))) * jnp.uint32(0x85EBCA6B)
        h = (h ^ (h >> jnp.uint32(13))) * jnp.uint32(0xC2B2AE35)
        h = h ^ (h >> jnp.uint32(16))
        r = (h >> jnp.uint32(9)).astype(jnp.int32)              # 23 random bits
        thresh = int(round(float(p_dropout) * float(1 << 23)))
        keep = r >= jnp.int32(thresh)                           # P(keep) = 1-p
        scale = jnp.float32(1.0 / (1.0 - float(p_dropout)))
        y = jnp.where(keep, y * scale, jnp.float32(0.0))

    y_ref[...] = y.astype(y_ref.dtype)

    # ---- Accumulate BatchNorm statistics (padded rows masked out) ----
    n_valid = scalars_ref[1]
    valid = (i * tile_b + row) < n_valid
    y_v = jnp.where(valid, y, jnp.float32(0.0))
    sum_ref[...] += jnp.sum(y_v, axis=0, keepdims=True)
    sumsq_ref[...] += jnp.sum(y_v * y_v, axis=0, keepdims=True)


def _bn_relu_kernel(scalars_ref, y_ref, sum_ref, sumsq_ref, params_ref, o_ref, *,
                    eps, use_bn):
    y = y_ref[...]
    if use_bn:
        n = scalars_ref[1].astype(jnp.float32)
        mean = sum_ref[...] / n                                  # (1, cp)
        var = jnp.maximum(sumsq_ref[...] / n - mean * mean, 0.0)
        inv_std = lax.rsqrt(var + jnp.float32(eps))
        gamma = params_ref[1:2, :]
        beta = params_ref[2:3, :]
        scale = gamma * inv_std                                  # fold gamma once
        shift = beta - mean * scale
        y = y * scale + shift
    o_ref[...] = jnp.maximum(y, 0.0).astype(o_ref.dtype)


def regressor_block(x, weight, bias, gamma, beta, *, p_dropout, seed,
                    eps=1e-5, apply_dropout=True, batchnorm=True, tile_b=512):
    """x: [B, in_c] f32; weight: [out_c, in_c] (PyTorch convention)."""
    B, in_c = x.shape
    out_c = weight.shape[0]

    # ---- lane-dense padding of the feature axis, batch tiling ----
    cp = ((out_c + 127) // 128) * 128
    tb = max(8, (int(tile_b) // 8) * 8)
    if B <= tb:
        tb = max(8, ((B + 7) // 8) * 8)
    Bp = ((B + tb - 1) // tb) * tb
    grid = (Bp // tb,)

    x_p = jnp.pad(x, ((0, Bp - B), (0, 0))).astype(jnp.bfloat16)
    w_t = jnp.pad(weight.T, ((0, 0), (0, cp - out_c))).astype(jnp.bfloat16)

    params = jnp.zeros((8, cp), jnp.float32)
    params = params.at[0, :out_c].set(bias.astype(jnp.float32))
    params = params.at[1, :out_c].set(gamma.astype(jnp.float32))
    params = params.at[2, :out_c].set(beta.astype(jnp.float32))

    scalars = jnp.array([int(seed), B], dtype=jnp.int32)

    vmem_limit = 32 * 1024 * 1024  # sized for v7x's smaller (64 MiB) VMEM

    # -------- pass 1: Linear + Dropout + stats accumulation --------
    k1 = functools.partial(
        _linear_dropout_stats_kernel,
        p_dropout=float(p_dropout), apply_dropout=bool(apply_dropout),
        tile_b=tb, cp=cp)
    bytes1 = Bp * in_c * 2 + in_c * cp * 2 + 8 * cp * 4 + Bp * cp * 4 + 2 * cp * 4
    y, col_sum, col_sumsq = pl.pallas_call(
        k1,
        out_shape=(jax.ShapeDtypeStruct((Bp, cp), jnp.float32),
                   jax.ShapeDtypeStruct((1, cp), jnp.float32),
                   jax.ShapeDtypeStruct((1, cp), jnp.float32)),
        grid_spec=pltpu.PrefetchScalarGridSpec(
            num_scalar_prefetch=1, grid=grid,
            in_specs=[
                pl.BlockSpec((tb, in_c), lambda i, s: (i, 0)),   # x tile
                pl.BlockSpec((in_c, cp), lambda i, s: (0, 0)),   # W^T resident
                pl.BlockSpec((8, cp), lambda i, s: (0, 0)),      # packed params
            ],
            out_specs=[
                pl.BlockSpec((tb, cp), lambda i, s: (i, 0)),     # y tile
                pl.BlockSpec((1, cp), lambda i, s: (0, 0)),      # col sum (resident)
                pl.BlockSpec((1, cp), lambda i, s: (0, 0)),      # col sumsq (resident)
            ]),
        compiler_params=pltpu.CompilerParams(
            dimension_semantics=("arbitrary",),
            vmem_limit_bytes=vmem_limit),
        cost_estimate=pl.CostEstimate(flops=2 * Bp * in_c * cp,
                                      transcendentals=0,
                                      bytes_accessed=bytes1),
    )(scalars, x_p, w_t, params)

    # -------- pass 2: BatchNorm (apply) + ReLU, batch-parallel --------
    k2 = functools.partial(_bn_relu_kernel, eps=float(eps), use_bn=bool(batchnorm))
    bytes2 = Bp * cp * 4 + 2 * cp * 4 + 8 * cp * 4 + Bp * cp * 4
    out_p = pl.pallas_call(
        k2,
        out_shape=jax.ShapeDtypeStruct((Bp, cp), jnp.float32),
        grid_spec=pltpu.PrefetchScalarGridSpec(
            num_scalar_prefetch=1, grid=grid,
            in_specs=[
                pl.BlockSpec((tb, cp), lambda i, s: (i, 0)),     # y tile
                pl.BlockSpec((1, cp), lambda i, s: (0, 0)),      # col sum
                pl.BlockSpec((1, cp), lambda i, s: (0, 0)),      # col sumsq
                pl.BlockSpec((8, cp), lambda i, s: (0, 0)),      # packed params
            ],
            out_specs=pl.BlockSpec((tb, cp), lambda i, s: (i, 0))),
        compiler_params=pltpu.CompilerParams(
            dimension_semantics=("parallel",),
            vmem_limit_bytes=vmem_limit),
        cost_estimate=pl.CostEstimate(flops=4 * Bp * cp,
                                      transcendentals=cp * grid[0],
                                      bytes_accessed=bytes2),
    )(scalars, y, col_sum, col_sumsq, params)

    return out_p[:B, :out_c]


if __name__ == "__main__":
    # Small shapes consistent with the module (a dense regressor head).
    B, in_c, out_c = 14, 32, 32          # B not a multiple of the tile -> exercises masking
    p_dropout = 0.5

    key = jax.random.PRNGKey(0)
    kx, kw, kb = jax.random.split(key, 3)
    x = jax.random.normal(kx, (B, in_c), dtype=jnp.float32)
    bound = 1.0 / (in_c ** 0.5)
    weight = jax.random.uniform(kw, (out_c, in_c), jnp.float32, -bound, bound)
    bias = jax.random.uniform(kb, (out_c,), jnp.float32, -bound, bound)
    gamma = jnp.ones((out_c,), jnp.float32)   # BatchNorm1d default weight
    beta = jnp.zeros((out_c,), jnp.float32)   # BatchNorm1d default bias

    # Stochastic (train-mode dropout) run: shape / finiteness check.
    out = jax.block_until_ready(
        regressor_block(x, weight, bias, gamma, beta,
                        p_dropout=p_dropout, seed=1234, tile_b=8))
    assert out.shape == (B, out_c)
    assert bool(jnp.all(jnp.isfinite(out)))

    # Deterministic path (dropout disabled) vs pure-JAX reference with the same
    # bf16 matmul operand casts.
    out_nd = jax.block_until_ready(
        regressor_block(x, weight, bias, gamma, beta,
                        p_dropout=p_dropout, seed=0,
                        apply_dropout=False, tile_b=8))
    xb = x.astype(jnp.bfloat16).astype(jnp.float32)
    wb = weight.astype(jnp.bfloat16).astype(jnp.float32)
    y_ref = xb @ wb.T + bias
    mean = y_ref.mean(axis=0, keepdims=True)
    var = ((y_ref - mean) ** 2).mean(axis=0, keepdims=True)
    ref = jnp.maximum(gamma * (y_ref - mean) / jnp.sqrt(var + 1e-5) + beta, 0.0)
    assert jnp.allclose(out_nd, ref, atol=2e-3, rtol=2e-3), \
        float(jnp.max(jnp.abs(out_nd - ref)))

    print("KERNEL_OK")
</pallas_src>

<mosaic_0001>
module attributes {stable_mosaic.version = 11 : i64} {
  func.func @_linear_dropout_stats_kernel(%arg0: i32, %arg1: memref<2xi32, #tpu.memory_space<smem>>, %arg2: memref<8x32xbf16, #tpu.memory_space<vmem>>, %arg3: memref<32x128xbf16, #tpu.memory_space<vmem>>, %arg4: memref<8x128xf32, #tpu.memory_space<vmem>>, %arg5: memref<8x128xf32, #tpu.memory_space<vmem>>, %arg6: memref<1x128xf32, #tpu.memory_space<vmem>>, %arg7: memref<1x128xf32, #tpu.memory_space<vmem>>) attributes {dimension_semantics = [#tpu.dimension_semantics<arbitrary>], iteration_bounds = array<i64: 2>, scalar_prefetch = 1 : i64, scratch_operands = 0 : i64, tpu.core_type = #tpu.core_type<tc>, window_params = [{transform_indices = @transform_0, window_bounds = array<i64: 8, 32>}, {pipeline_mode = #tpu.pipeline_mode<synchronous>, transform_indices = @transform_1, window_bounds = array<i64: 32, 128>}, {pipeline_mode = #tpu.pipeline_mode<synchronous>, transform_indices = @transform_2, window_bounds = array<i64: 8, 128>}, {transform_indices = @transform_3, window_bounds = array<i64: 8, 128>}, {pipeline_mode = #tpu.pipeline_mode<synchronous>, transform_indices = @transform_4, window_bounds = array<i64: 1, 128>}, {pipeline_mode = #tpu.pipeline_mode<synchronous>, transform_indices = @transform_5, window_bounds = array<i64: 1, 128>}]} {
    %c0_i32 = arith.constant 0 : i32
    %0 = arith.cmpi eq, %arg0, %c0_i32 : i32
    %1 = arith.extui %0 : i1 to i32
    %c0_i32_0 = arith.constant 0 : i32
    %2 = arith.cmpi ne, %1, %c0_i32_0 : i32
    scf.if %2 {
      %cst_24 = arith.constant 0.000000e+00 : f32
      %62 = vector.broadcast %cst_24 : f32 to vector<1x128xf32>
      %c0_25 = arith.constant 0 : index
      %c0_26 = arith.constant 0 : index
      %63 = vector.load %arg6[%c0_25, %c0_26] : memref<1x128xf32, #tpu.memory_space<vmem>>, vector<1x128xf32>
      tpu.vector_store %arg6[%c0_25, %c0_26], %62 {strides = array<i32>} : memref<1x128xf32, #tpu.memory_space<vmem>>, vector<1x128xf32>,
      %cst_27 = arith.constant 0.000000e+00 : f32
      %64 = vector.broadcast %cst_27 : f32 to vector<1x128xf32>
      %c0_28 = arith.constant 0 : index
      %c0_29 = arith.constant 0 : index
      %65 = vector.load %arg7[%c0_28, %c0_29] : memref<1x128xf32, #tpu.memory_space<vmem>>, vector<1x128xf32>
      tpu.vector_store %arg7[%c0_28, %c0_29], %64 {strides = array<i32>} : memref<1x128xf32, #tpu.memory_space<vmem>>, vector<1x128xf32>,
    } else {
    }
    %c0 = arith.constant 0 : index
    %c0_1 = arith.constant 0 : index
    %3 = vector.load %arg4[%c0, %c0_1] : memref<8x128xf32, #tpu.memory_space<vmem>>, vector<1x128xf32>
    %c0_2 = arith.constant 0 : index
    %c0_3 = arith.constant 0 : index
    %4 = vector.load %arg2[%c0_2, %c0_3] : memref<8x32xbf16, #tpu.memory_space<vmem>>, vector<8x32xbf16>
    %c0_4 = arith.constant 0 : index
    %c0_5 = arith.constant 0 : index
    %5 = vector.load %arg3[%c0_4, %c0_5] : memref<32x128xbf16, #tpu.memory_space<vmem>>, vector<32x128xbf16>
    %cst = arith.constant dense<0.000000e+00> : vector<8x128xf32>
    %6 = tpu.matmul %4, %5, %cst {dimension_numbers = #tpu.dot_dimension_numbers<[1], [0], [0], [1], [0, 0, 1, 1], [], []>} : vector<8x32xbf16>, vector<32x128xbf16>, vector<8x128xf32> -> vector<8x128xf32>
    %7 = vector.broadcast %3 : vector<1x128xf32> to vector<8x128xf32>
    %8 = arith.addf %6, %7 : vector<8x128xf32>
    %9 = tpu.iota {dimensions = array<i32: 0>} : vector<8x128xi32>
    %10 = tpu.iota {dimensions = array<i32: 1>} : vector<8x128xi32>
    %c0_6 = arith.constant 0 : index
    %11 = memref.load %arg1[%c0_6] : memref<2xi32, #tpu.memory_space<smem>>
    %c8_i32 = arith.constant 8 : i32
    %12 = arith.muli %arg0, %c8_i32 : i32
    %13 = vector.broadcast %12 : i32 to vector<8x128xi32>
    %14 = arith.addi %13, %9 : vector<8x128xi32>
    %c128_i32 = arith.constant 128 : i32
    %15 = vector.broadcast %c128_i32 : i32 to vector<8x128xi32>
    %16 = arith.muli %14, %15 : vector<8x128xi32>
    %17 = arith.addi %16, %10 : vector<8x128xi32>
    %c-1640531527_i32 = arith.constant -1640531527 : i32
    %18 = arith.muli %11, %c-1640531527_i32 : i32
    %19 = vector.broadcast %18 : i32 to vector<8x128xi32>
    %20 = arith.addi %17, %19 : vector<8x128xi32>
    %c16_i32 = arith.constant 16 : i32
    %21 = vector.broadcast %c16_i32 : i32 to vector<8x128xi32>
    %22 = arith.shrui %20, %21 : vector<8x128xi32>
    %23 = arith.xori %20, %22 : vector<8x128xi32>
    %c-2048144789_i32 = arith.constant -2048144789 : i32
    %24 = vector.broadcast %c-2048144789_i32 : i32 to vector<8x128xi32>
    %25 = arith.muli %23, %24 : vector<8x128xi32>
    %c13_i32 = arith.constant 13 : i32
    %26 = vector.broadcast %c13_i32 : i32 to vector<8x128xi32>
    %27 = arith.shrui %25, %26 : vector<8x128xi32>
    %28 = arith.xori %25, %27 : vector<8x128xi32>
    %c-1028477387_i32 = arith.constant -1028477387 : i32
    %29 = vector.broadcast %c-1028477387_i32 : i32 to vector<8x128xi32>
    %30 = arith.muli %28, %29 : vector<8x128xi32>
    %c16_i32_7 = arith.constant 16 : i32
    %31 = vector.broadcast %c16_i32_7 : i32 to vector<8x128xi32>
    %32 = arith.shrui %30, %31 : vector<8x128xi32>
    %33 = arith.xori %30, %32 : vector<8x128xi32>
    %c9_i32 = arith.constant 9 : i32
    %34 = vector.broadcast %c9_i32 : i32 to vector<8x128xi32>
    %35 = arith.shrui %33, %34 : vector<8x128xi32>
    %c4194304_i32 = arith.constant 4194304 : i32
    %36 = vector.broadcast %c4194304_i32 : i32 to vector<8x128xi32>
    %37 = arith.cmpi sge, %35, %36 : vector<8x128xi32>
    %cst_8 = arith.constant 2.000000e+00 : f32
    %38 = vector.broadcast %cst_8 : f32 to vector<8x128xf32>
    %39 = arith.mulf %8, %38 : vector<8x128xf32>
    %cst_9 = arith.constant 0.000000e+00 : f32
    %40 = vector.broadcast %cst_9 : f32 to vector<8x128xf32>
    %41 = arith.select %37, %39, %40 : vector<8x128xi1>, vector<8x128xf32>
    %c0_10 = arith.constant 0 : index
    %c0_11 = arith.constant 0 : index
    %42 = vector.load %arg5[%c0_10, %c0_11] : memref<8x128xf32, #tpu.memory_space<vmem>>, vector<8x128xf32>
    tpu.vector_store %arg5[%c0_10, %c0_11], %41 {strides = array<i32>} : memref<8x128xf32, #tpu.memory_space<vmem>>, vector<8x128xf32>,
    %c1 = arith.constant 1 : index
    %43 = memref.load %arg1[%c1] : memref<2xi32, #tpu.memory_space<smem>>
    %c8_i32_12 = arith.constant 8 : i32
    %44 = arith.muli %arg0, %c8_i32_12 : i32
    %45 = vector.broadcast %44 : i32 to vector<8x128xi32>
    %46 = arith.addi %45, %9 : vector<8x128xi32>
    %47 = vector.broadcast %43 : i32 to vector<8x128xi32>
    %48 = arith.cmpi slt, %46, %47 : vector<8x128xi32>
    %cst_13 = arith.constant 0.000000e+00 : f32
    %49 = vector.broadcast %cst_13 : f32 to vector<8x128xf32>
    %50 = arith.select %48, %41, %49 : vector<8x128xi1>, vector<8x128xf32>
    %c0_14 = arith.constant 0 : index
    %c0_15 = arith.constant 0 : index
    %51 = vector.load %arg6[%c0_14, %c0_15] : memref<1x128xf32, #tpu.memory_space<vmem>>, vector<1x128xf32>
    %cst_16 = arith.constant dense<0.000000e+00> : vector<128xf32>
    %52 = vector.multi_reduction <add>, %50, %cst_16 [0] : vector<8x128xf32> to vector<128xf32>
    %53 = vector.shape_cast %52 : vector<128xf32> to vector<1x128xf32>
    %54 = arith.addf %51, %53 : vector<1x128xf32>
    %c0_17 = arith.constant 0 : index
    %c0_18 = arith.constant 0 : index
    %55 = vector.load %arg6[%c0_17, %c0_18] : memref<1x128xf32, #tpu.memory_space<vmem>>, vector<1x128xf32>
    tpu.vector_store %arg6[%c0_17, %c0_18], %54 {strides = array<i32>} : memref<1x128xf32, #tpu.memory_space<vmem>>, vector<1x128xf32>,
    %c0_19 = arith.constant 0 : index
    %c0_20 = arith.constant 0 : index
    %56 = vector.load %arg7[%c0_19, %c0_20] : memref<1x128xf32, #tpu.memory_space<vmem>>, vector<1x128xf32>
    %57 = arith.mulf %50, %50 : vector<8x128xf32>
    %cst_21 = arith.constant dense<0.000000e+00> : vector<128xf32>
    %58 = vector.multi_reduction <add>, %57, %cst_21 [0] : vector<8x128xf32> to vector<128xf32>
    %59 = vector.shape_cast %58 : vector<128xf32> to vector<1x128xf32>
    %60 = arith.addf %56, %59 : vector<1x128xf32>
    %c0_22 = arith.constant 0 : index
    %c0_23 = arith.constant 0 : index
    %61 = vector.load %arg7[%c0_22, %c0_23] : memref<1x128xf32, #tpu.memory_space<vmem>>, vector<1x128xf32>
    tpu.vector_store %arg7[%c0_22, %c0_23], %60 {strides = array<i32>} : memref<1x128xf32, #tpu.memory_space<vmem>>, vector<1x128xf32>,
    return
  }
  func.func @transform_0(%arg0: i32, %arg1: memref<2xi32, #tpu.memory_space<smem>>) -> (i32, i32) {
    %c0_i32 = arith.constant 0 : i32
    %c0_i32_0 = arith.constant 0 : i32
    return %arg0, %c0_i32 : i32, i32
  }
  func.func @transform_1(%arg0: i32, %arg1: memref<2xi32, #tpu.memory_space<smem>>) -> (i32, i32) {
    %c0_i32 = arith.constant 0 : i32
    %c0_i32_0 = arith.constant 0 : i32
    %c0_i32_1 = arith.constant 0 : i32
    return %c0_i32, %c0_i32_0 : i32, i32
  }
  func.func @transform_2(%arg0: i32, %arg1: memref<2xi32, #tpu.memory_space<smem>>) -> (i32, i32) {
    %c0_i32 = arith.constant 0 : i32
    %c0_i32_0 = arith.constant 0 : i32
    %c0_i32_1 = arith.constant 0 : i32
    return %c0_i32, %c0_i32_0 : i32, i32
  }
  func.func @transform_3(%arg0: i32, %arg1: memref<2xi32, #tpu.memory_space<smem>>) -> (i32, i32) {
    %c0_i32 = arith.constant 0 : i32
    %c0_i32_0 = arith.constant 0 : i32
    return %arg0, %c0_i32 : i32, i32
  }
  func.func @transform_4(%arg0: i32, %arg1: memref<2xi32, #tpu.memory_space<smem>>) -> (i32, i32) {
    %c0_i32 = arith.constant 0 : i32
    %c0_i32_0 = arith.constant 0 : i32
    %c0_i32_1 = arith.constant 0 : i32
    return %c0_i32, %c0_i32_0 : i32, i32
  }
  func.func @transform_5(%arg0: i32, %arg1: memref<2xi32, #tpu.memory_space<smem>>) -> (i32, i32) {
    %c0_i32 = arith.constant 0 : i32
    %c0_i32_0 = arith.constant 0 : i32
    %c0_i32_1 = arith.constant 0 : i32
    return %c0_i32, %c0_i32_0 : i32, i32
  }
}

</mosaic_0001>

<llo_original>
// kernel: tpu_custom_call.1
$region0: #{tpu_custom_call.1}
  #allocation0 [shape = 'u32[]', space=smem, size = 0x4, offset = 0x4, fixed_abs, tag = 'smem constant byte address 0x4 - core index']
  #allocation1 [shape = 'u32[144,128]{1,0:T(1,128)}', space=vmem, size = 0x12000, scoped, tag = 'internal scratch']
  #allocation2 [shape = 's32[1]{0}', space=sflag, size = 0x4, scoped, tag = 'scoped memory for tpu_custom_call.1']
  #allocation3 [shape = 'u8[512]{0}', space=smem, size = 0x200, scoped, tag = 'prefetched SMEM operand 0']
  %s0 = inlined_call_operand.hbm [shape: s32[2], index: 0, kind: input, shape index: {}]
  %s1 = inlined_call_operand.hbm [shape: bf16[16,32], index: 1, kind: input, shape index: {}]
  %s2 = inlined_call_operand.hbm [shape: bf16[32,128], index: 2, kind: input, shape index: {}]
  %s3 = inlined_call_operand.vmem [shape: f32[8,128], index: 3, kind: input, shape index: {}]
  %s4 = inlined_call_operand.hbm [shape: f32[16,128], index: 4, kind: output, shape index: {0}]
  %s5 = inlined_call_operand.hbm [shape: f32[1,128], index: 5, kind: output, shape index: {1}]
  %s6 = inlined_call_operand.hbm [shape: f32[1,128], index: 6, kind: output, shape index: {2}]
  %7 = xla_tuple %s4, %s5, %s6
  %s8 = sld [smem:[#allocation0]]
  $region73: #{tpu_custom_call.1} parent=0
    _
  %s10 = ssub.s32 1, %s8
  %s11 = scalar_select 0, %s10, %s8
  %13 = dma.hbm_to_smem %s0, 16, [#allocation3], [#allocation2]
  %14 = dma.done [#allocation2], 16
  %15 = sfence
  $region1: #{tpu_custom_call.1} parent=0
    #allocation4 [shape = 'u8[4096]{0}', space=vmem, size = 0x1000, scoped, tag = 'input window, operand 1']
    #allocation5 [shape = 's32[2]{0}', space=sflag, size = 0x8, scoped, tag = 'scoped memory for tpu_custom_call.1']
    #allocation6 [shape = 's32[2]{0}', space=sflag, size = 0x8, scoped, tag = 'scoped memory for tpu_custom_call.1']
    #allocation7 [shape = 'u8[8192]{0}', space=vmem, size = 0x2000, scoped, tag = 'input window, operand 2, single buffered']
    #allocation8 [shape = 's32[1]{0}', space=sflag, size = 0x4, scoped, tag = 'scoped memory for tpu_custom_call.1']
    #allocation9 [shape = 'u8[8192]{0}', space=vmem, size = 0x2000, scoped, tag = 'output window, operand 0']
    #allocation10 [shape = 'u8[512]{0}', space=vmem, size = 0x400, scoped, tag = 'output window, operand 1, single buffered']
    #allocation11 [shape = 's32[1]{0}', space=sflag, size = 0x4, scoped, tag = 'scoped memory for tpu_custom_call.1']
    #allocation12 [shape = 'u8[512]{0}', space=vmem, size = 0x400, scoped, tag = 'output window, operand 2, single buffered']
    %16 = vsyncpa [#allocation5], 0
    %s17 = scalar_lea.sflag [#allocation5], 1
    %18 = vsyncpa %s17, 0
    %19 = vsyncpa [#allocation8], 0
    %20 = vsyncpa [#allocation6], 0
    %s21 = scalar_lea.sflag [#allocation6], 1
    %22 = vsyncpa %s21, 0
    %23 = vsyncpa [#allocation11], 0
    loop: start=0, step=1, limit=4
    $region2: #{tpu_custom_call.1} parent=1 // loop_pre_header
      _
    $region3: #{tpu_custom_call.1} parent=1 // loop_header
      %s25 = sphi 0, %s29
      %p26 = scmp.ge.s32.totalorder %s25, 4
      %s35 = sphi 0, %s37
      %s38 = sphi 0, %s35
      %s39 = sphi 0, %s38
      %s55 = sphi 0, %s39
      %s59 = sphi 0, %s59
      %s61 = sphi 0, %s59
      %s62 = sphi 0, %s61
      %s76 = sphi 0, %s62
      %s80 = sphi 0, %s80
      %s82 = sphi 0, %s80
      %s83 = sphi 0, %s82
      %s97 = sphi 0, %s83
      %s103 = sphi 0, %s105
      %s106 = sphi 0, %s103
      %s107 = sphi 0, %s106
      %s123 = sphi 0, %s107
      %s127 = sphi 0, %s127
      %s129 = sphi 0, %s127
      %s130 = sphi 0, %s129
      %s144 = sphi 0, %s130
      %s148 = sphi 0, %s148
      %s150 = sphi 0, %s148
      %s151 = sphi 0, %s150
      %s165 = sphi 0, %s151
    $region4: #{tpu_custom_call.1} parent=1 // loop_header_branch
      %28 = sbr.rel (%p26) target = $region8
    $region5: #{tpu_custom_call.1} parent=1 // loop_body
      %s30 = ssub.s32 %s25, 1
      %s31 = ssub.s32 %s25, 2
      %s32 = sadd.s32 %s25, 1
      %s33 = ssub.s32 %s25, %s32
      %p34 = scmp.eq.s32.totalorder %s33, 0
      %s36 = sadd.s32 %s35, 1
      %s37 = scalar_select %p34, %s35, %s36
      %p40 = pneg %p34
      %p41 = scmp.eq.s32.totalorder %s25, 1
      %p42 = por %p40, %p41
      %p43 = scmp.ne.s32.totalorder %s35, %s38
      %p44 = scmp.eq.s32.totalorder %s25, 0
      %p45 = por %p43, %p44
      %p46 = scmp.ne.s32.totalorder %s35, %s38
      %p47 = scmp.eq.s32.totalorder %s30, 1
      %p48 = por %p46, %p47
      %p49 = scmp.ne.s32.totalorder %s38, %s39
      %p50 = scmp.eq.s32.totalorder %s30, 0
      %p51 = por %p49, %p50
      %p52 = scmp.ne.s32.totalorder %s38, %s39
      %p53 = scmp.eq.s32.totalorder %s31, 1
      %p54 = por %p52, %p53
      %p56 = scmp.ne.s32.totalorder %s39, %s55
      %p57 = scmp.eq.s32.totalorder %s31, 0
      %p58 = por %p56, %p57
      %s60 = sadd.s32 %s59, 1
      %p63 = scmp.eq.s32.totalorder %s25, 1
      %p64 = scmp.ne.s32.totalorder %s59, %s61
      %p65 = scmp.eq.s32.totalorder %s25, 0
      %p66 = por %p64, %p65
      %p67 = scmp.ne.s32.totalorder %s59, %s61
      %p68 = scmp.eq.s32.totalorder %s30, 1
      %p69 = por %p67, %p68
      %p70 = scmp.ne.s32.totalorder %s61, %s62
      %p71 = scmp.eq.s32.totalorder %s30, 0
      %p72 = por %p70, %p71
      %p73 = scmp.ne.s32.totalorder %s61, %s62
      %p74 = scmp.eq.s32.totalorder %s31, 1
      %p75 = por %p73, %p74
      %p77 = scmp.ne.s32.totalorder %s62, %s76
      %p78 = scmp.eq.s32.totalorder %s31, 0
      %p79 = por %p77, %p78
      %s81 = sadd.s32 %s80, 1
      %p84 = scmp.eq.s32.totalorder %s25, 1
      %p85 = scmp.ne.s32.totalorder %s80, %s82
      %p86 = scmp.eq.s32.totalorder %s25, 0
      %p87 = por %p85, %p86
      %p88 = scmp.ne.s32.totalorder %s80, %s82
      %p89 = scmp.eq.s32.totalorder %s30, 1
      %p90 = por %p88, %p89
      %p91 = scmp.ne.s32.totalorder %s82, %s83
      %p92 = scmp.eq.s32.totalorder %s30, 0
      %p93 = por %p91, %p92
      %p94 = scmp.ne.s32.totalorder %s82, %s83
      %p95 = scmp.eq.s32.totalorder %s31, 1
      %p96 = por %p94, %p95
      %p98 = scmp.ne.s32.totalorder %s83, %s97
      %p99 = scmp.eq.s32.totalorder %s31, 0
      %p100 = por %p98, %p99
      %s101 = ssub.s32 %s25, %s32
      %p102 = scmp.eq.s32.totalorder %s101, 0
      %s104 = sadd.s32 %s103, 1
      %s105 = scalar_select %p102, %s103, %s104
      %p108 = pneg %p102
      %p109 = scmp.eq.s32.totalorder %s25, 1
      %p110 = por %p108, %p109
      %p111 = scmp.ne.s32.totalorder %s103, %s106
      %p112 = scmp.eq.s32.totalorder %s25, 0
      %p113 = por %p111, %p112
      %p114 = scmp.ne.s32.totalorder %s103, %s106
      %p115 = scmp.eq.s32.totalorder %s30, 1
      %p116 = por %p114, %p115
      %p117 = scmp.ne.s32.totalorder %s106, %s107
      %p118 = scmp.eq.s32.totalorder %s30, 0
      %p119 = por %p117, %p118
      %p120 = scmp.ne.s32.totalorder %s106, %s107
      %p121 = scmp.eq.s32.totalorder %s31, 1
      %p122 = por %p120, %p121
      %p124 = scmp.ne.s32.totalorder %s107, %s123
      %p125 = scmp.eq.s32.totalorder %s31, 0
      %p126 = por %p124, %p125
      %s128 = sadd.s32 %s127, 1
      %p131 = scmp.eq.s32.totalorder %s25, 1
      %p132 = scmp.ne.s32.totalorder %s127, %s129
      %p133 = scmp.eq.s32.totalorder %s25, 0
      %p134 = por %p132, %p133
      %p135 = scmp.ne.s32.totalorder %s127, %s129
      %p136 = scmp.eq.s32.totalorder %s30, 1
      %p137 = por %p135, %p136
      %p138 = scmp.ne.s32.totalorder %s129, %s130
      %p139 = scmp.eq.s32.totalorder %s30, 0
      %p140 = por %p138, %p139
      %p141 = scmp.ne.s32.totalorder %s129, %s130
      %p142 = scmp.eq.s32.totalorder %s31, 1
      %p143 = por %p141, %p142
      %p145 = scmp.ne.s32.totalorder %s130, %s144
      %p146 = scmp.eq.s32.totalorder %s31, 0
      %p147 = por %p145, %p146
      %s149 = sadd.s32 %s148, 1
      %p152 = scmp.eq.s32.totalorder %s25, 1
      %p153 = scmp.ne.s32.totalorder %s148, %s150
      %p154 = scmp.eq.s32.totalorder %s25, 0
      %p155 = por %p153, %p154
      %p156 = scmp.ne.s32.totalorder %s148, %s150
      %p157 = scmp.eq.s32.totalorder %s30, 1
      %p158 = por %p156, %p157
      %p159 = scmp.ne.s32.totalorder %s150, %s151
      %p160 = scmp.eq.s32.totalorder %s30, 0
      %p161 = por %p159, %p160
      %p162 = scmp.ne.s32.totalorder %s150, %s151
      %p163 = scmp.eq.s32.totalorder %s31, 1
      %p164 = por %p162, %p163
      %p166 = scmp.ne.s32.totalorder %s151, %s165
      %p167 = scmp.eq.s32.totalorder %s31, 0
      %p168 = por %p166, %p167
      %p169 = scmp.le.s32.totalorder 1, %s25
      %p170 = scmp.lt.s32.totalorder %s25, 3
      %p171 = pnand %p169, %p170
      %p172 = pneg %p171
      // Predicated region
      $region9: #{tpu_custom_call.1} parent=5 // pred_check
        _
      $region10: #{tpu_custom_call.1} parent=5 // pred_check_branch
        %174 = sbr.rel (%p171) target = $region12
      $region11: #{tpu_custom_call.1} parent=5 // pred_region
        %s175 = ssub.s32 %s25, 1
        // Predicated region
        $region13: #{tpu_custom_call.1} parent=11 // pred_check
          %p176 = pneg %p72
        $region14: #{tpu_custom_call.1} parent=11 // pred_check_branch
          %178 = sbr.rel (%p176) target = $region16
        $region15: #{tpu_custom_call.1} parent=11 // pred_region
          %s180 = ssub.s32 256, 256
          %181 = vsyncadd [#allocation8], %s180
          %s182 = sshll.u32 [#allocation7], 4
          %s183 = int_to_ptr.vmem [resolvable:$true] %s182
          %188 = dma.hbm_to_vmem [thread:$0]  %s2, 256, %s183, [#allocation8], 64, 64, 4
        $region16: #{tpu_custom_call.1} parent=11 // pred_fallthru
          _
        // Predicated region
        $region17: #{tpu_custom_call.1} parent=11 // pred_check
          %p189 = pneg %p93
        $region18: #{tpu_custom_call.1} parent=11 // pred_check_branch
          %191 = sbr.rel (%p189) target = $region20
        $region19: #{tpu_custom_call.1} parent=11 // pred_region
          _
        $region20: #{tpu_custom_call.1} parent=11 // pred_fallthru
          _
      $region12: #{tpu_custom_call.1} parent=5 // pred_fallthru
        _
      %p192 = scmp.lt.s32.totalorder %s25, 2
      // Predicated region
      $region21: #{tpu_custom_call.1} parent=5 // pred_check
        %p193 = pneg %p192
      $region22: #{tpu_custom_call.1} parent=5 // pred_check_branch
        %195 = sbr.rel (%p193) target = $region24
      $region23: #{tpu_custom_call.1} parent=5 // pred_region
        // Predicated region
        $region25: #{tpu_custom_call.1} parent=23 // pred_check
          %p196 = pneg %p45
        $region26: #{tpu_custom_call.1} parent=23 // pred_check_branch
          %198 = sbr.rel (%p196) target = $region28
        $region27: #{tpu_custom_call.1} parent=23 // pred_region
          %s199 = sand.u32 %s35, 1
          %s200 = scalar_lea.sflag [#allocation5], %s199
          %s201 = sand.u32 %s35, 1
          %s202 = smul.addr %s201, 4
          %s203 = scalar_lea.vmem [#allocation4], %s202
          %s205 = ssub.s32 64, 64
          %206 = vsyncadd %s200, %s205
          %s207 = smul.addr %s25, 64
          %s208 = scalar_lea.hbm %s1, %s207
          %s210 = sshll.u32 %s203, 4
          %s211 = int_to_ptr.vmem [resolvable:$true] %s210
          %213 = dma.hbm_to_vmem [thread:$0]  %s208, 64, %s211, %s200
        $region28: #{tpu_custom_call.1} parent=23 // pred_fallthru
          _
      $region24: #{tpu_custom_call.1} parent=5 // pred_fallthru
        _
      %p214 = scmp.le.s32.totalorder 1, %s25
      %p215 = scmp.lt.s32.totalorder %s25, 3
      %p216 = pnand %p214, %p215
      %p217 = pneg %p216
      // Predicated region
      $region29: #{tpu_custom_call.1} parent=5 // pred_check
        _
      $region30: #{tpu_custom_call.1} parent=5 // pred_check_branch
        %219 = sbr.rel (%p216) target = $region32
      $region31: #{tpu_custom_call.1} parent=5 // pred_region
        %s220 = ssub.s32 %s25, 1
        %s221 = sand.u32 %s38, 1
        %s222 = scalar_lea.sflag [#allocation5], %s221
        %s223 = sand.u32 %s38, 1
        %s224 = smul.addr %s223, 4
        %s225 = scalar_lea.vmem [#allocation4], %s224
        // Predicated region
        $region33: #{tpu_custom_call.1} parent=31 // pred_check
          %p226 = pneg %p51
        $region34: #{tpu_custom_call.1} parent=31 // pred_check_branch
          %228 = sbr.rel (%p226) target = $region36
        $region35: #{tpu_custom_call.1} parent=31 // pred_region
          %229 = dma.done %s222, 64
        $region36: #{tpu_custom_call.1} parent=31 // pred_fallthru
          _
        // Predicated region
        $region37: #{tpu_custom_call.1} parent=31 // pred_check
          %p230 = pneg %p72
        $region38: #{tpu_custom_call.1} parent=31 // pred_check_branch
          %232 = sbr.rel (%p230) target = $region40
        $region39: #{tpu_custom_call.1} parent=31 // pred_region
          %233 = dma.done [#allocation8], 256
        $region40: #{tpu_custom_call.1} parent=31 // pred_fallthru
          _
        %s234 = sand.u32 %s38, 1
        %s235 = scalar_lea.sflag [#allocation5], %s234
        %s236 = sand.u32 %s38, 1
        %s237 = smul.addr %s236, 4
        %s238 = scalar_lea.vmem [#allocation4], %s237
        %p239 = pneg %p51
        %p240 = pneg %p48
        %p241 = pneg %p72
        %p242 = pneg %p69
        %p243 = pneg %p93
        %p244 = pneg %p90
        %p245 = pneg %p119
        %p246 = pneg %p116
        %s247 = sand.u32 %s106, 1
        %s248 = scalar_lea.sflag [#allocation6], %s247
        %s249 = sand.u32 %s106, 1
        %s250 = smul.addr %s249, 8
        %s251 = scalar_lea.vmem [#allocation9], %s250
        %p252 = pneg %p140
        %p253 = pneg %p137
        %p254 = pneg %p161
        %p255 = pneg %p158
        %p257 = scmp.eq.s32.totalorder %s30, 0
        // Predicated region
        $region41: #{tpu_custom_call.1} parent=31 // pred_check
          %p258 = pneg %p257
        $region42: #{tpu_custom_call.1} parent=31 // pred_check_branch
          %260 = sbr.rel (%p258) target = $region44
        $region43: #{tpu_custom_call.1} parent=31 // pred_region
          %261 = vst [vmem:[#allocation10] sm:$0x1] 0.0
          %262 = vst [vmem:[#allocation12] sm:$0x1] 0.0
        $region44: #{tpu_custom_call.1} parent=31 // pred_fallthru
          _
        %v263 = vld [vmem:[%s3] sm:$0x1]
        %v264 = vld [vmem:[%s225] sm:$0xf]
        %v265 = vld [vmem:[#allocation7] sm:$0xf]
        %v266 = vld [vmem:[#allocation7 + $0x4] sm:$0xf]
        %v267 = vld [vmem:[#allocation7 + $0x8] sm:$0xf]
        %v268 = vld [vmem:[#allocation7 + $0xc] sm:$0xf]
        %v269 = vlaneseq
        %v270 = vshrl.u32 %v269, 7
        %v271 = vsub.s32 0, %v270
        %v272 = vrot.slane %v263, %v271
        %v277 = vunpack.c.l.b16 %v265
        %v278 = vunpack.c.l.b16 %v266
        %v279 = vunpack.c.l.b16 %v267
        %v280 = vunpack.c.l.b16 %v268
        %v281 = vpack.c.b16 %v278, %v277
        %v282 = vpack.c.b16 %v280, %v279
        %vm285 = vcmask 261120
        %v287 = vsel %vm285, %v264, 0
        %289 = vmatprep.subr.bf16.mxu0 0
        %290 = vmatpush1.bf16.msra.mxu0 %v281
        %291 = vmatprep.subr.bf16.mxu0 0
        %292 = vmatpush1.bf16.msra.mxu0 %v282
        %293 = vmatprep.subr.bf16.mxu0 0
        %294 = vmatpush1.bf16.msra.mxu0 0
        %295 = vmatprep.subr.bf16.mxu0 0
        %296 = vmatpush1.bf16.msra.mxu0 0
        %297 = vmatprep.subr.bf16.mxu0 0
        %298 = vmatpush1.bf16.msra.mxu0 0
        %299 = vmatprep.subr.bf16.mxu0 0
        %300 = vmatpush1.bf16.msra.mxu0 0
        %301 = vmatprep.subr.bf16.mxu0 0
        %302 = vmatpush1.bf16.msra.mxu0 0
        %303 = vmatprep.subr.bf16.mxu0 0
        %304 = vmatpush1.bf16.msra.mxu0 0
        %305 = vmatprep.subr.bf16.mxu0 0
        %306 = vmatpush1.bf16.msra.mxu0 0
        %307 = vmatprep.subr.bf16.mxu0 0
        %308 = vmatpush1.bf16.msra.mxu0 0
        %309 = vmatprep.subr.bf16.mxu0 0
        %310 = vmatpush1.bf16.msra.mxu0 0
        %311 = vmatprep.subr.bf16.mxu0 0
        %312 = vmatpush1.bf16.msra.mxu0 0
        %313 = vmatprep.subr.bf16.mxu0 0
        %314 = vmatpush1.bf16.msra.mxu0 0
        %315 = vmatprep.subr.bf16.mxu0 0
        %316 = vmatpush1.bf16.msra.mxu0 0
        %317 = vmatprep.subr.bf16.mxu0 0
        %318 = vmatpush1.bf16.msra.mxu0 0
        %319 = vmatprep.subr.bf16.mxu0 0
        %320 = vmatpush1.bf16.msra.mxu0 0
        %321 = vmatprep.mubr.bf16.mxu0 0
        %322 = vmatmul.mubr.bf16.gmra.mrb[0].mxu0 %v287
        %v323 = vpop.f32.mrb[0].mxu0
        %v324 = vadd.f32 %v272, %v323
        %v325 = vpop.f32.mrb[0].mxu0
        %v326 = vpop.f32.mrb[0].mxu0
        %v327 = vpop.f32.mrb[0].mxu0
        %328 = vdwg.mxu0
        %v329 = vlaneseq
        %v330 = vshrl.u32 %v329, 7
        %v331 = vlaneseq
        %v332 = vand.u32 %v331, 127
        %s333 = sld [smem:[#allocation3]]
        %s334 = smul.u32 %s30, 8
        %v335 = vstv %s334
        %v336 = vadd.s32 %v335, %v330
        %v337 = vmul.u32 %v336, 128
        %v338 = vadd.s32 %v337, %v332
        %s339 = smul.u32 %s333, 2654435769
        %v340 = vstv %s339
        %v341 = vadd.s32 %v338, %v340
        %v342 = vshrl.u32 %v341, 16
        %v343 = vxor.u32 %v341, %v342
        %v344 = vmul.u32 %v343, 2246822507
        %v345 = vshrl.u32 %v344, 13
        %v346 = vxor.u32 %v344, %v345
        %v347 = vmul.u32 %v346, 3266489909
        %v348 = vshrl.u32 %v347, 16
        %v349 = vxor.u32 %v347, %v348
        %v350 = vshrl.u32 %v349, 9
        %vm351 = vcmp.ge.s32.totalorder %v350, 4194304
        %v352 = vmul.f32 %v324, 2.0
        %v353 = vsel %vm351, %v352, 0.0
        %354 = vst [vmem:[%s251] sm:$0xff] %v353
        %s355 = sld [smem:[#allocation3 + $0x1]]
        %v356 = vstv %s355
        %vm357 = vcmp.lt.s32.totalorder %v336, %v356
        %v358 = vsel %vm357, %v353, 0.0
        %v359 = vld [vmem:[#allocation10] sm:$0x1]
        %v360 = vrot.slane %v358, 4
        %v361 = vadd.f32 %v358, %v360
        %v362 = vrot.slane %v361, 2
        %v363 = vadd.f32 %v361, %v362
        %v364 = vrot.slane %v363, 1
        %v365 = vadd.f32 %v363, %v364
        %v366 = vadd.f32 %v359, %v365
        %367 = vst [vmem:[#allocation10] sm:$0x1] %v366
        %v368 = vld [vmem:[#allocation12] sm:$0x1]
        %v369 = vmul.f32 %v358, %v358
        %v370 = vrot.slane %v369, 4
        %v371 = vadd.f32 %v369, %v370
        %v372 = vrot.slane %v371, 2
        %v373 = vadd.f32 %v371, %v372
        %v374 = vrot.slane %v373, 1
        %v375 = vadd.f32 %v373, %v374
        %v376 = vadd.f32 %v368, %v375
        %377 = vst [vmem:[#allocation12] sm:$0x1] %v376
        %s378 = sand.u32 %s106, 1
        %s379 = scalar_lea.sflag [#allocation6], %s378
        %s380 = sand.u32 %s106, 1
        %s381 = smul.addr %s380, 8
        %s382 = scalar_lea.vmem [#allocation9], %s381
        // Predicated region
        $region45: #{tpu_custom_call.1} parent=31 // pred_check
          %p383 = pneg %p116
        $region46: #{tpu_custom_call.1} parent=31 // pred_check_branch
          %385 = sbr.rel (%p383) target = $region48
        $region47: #{tpu_custom_call.1} parent=31 // pred_region
          %s387 = ssub.s32 128, 128
          %388 = vsyncadd %s379, %s387
          %s389 = smul.addr %s30, 128
          %s390 = scalar_lea.hbm %s4, %s389
          %s392 = sshll.u32 %s382, 4
          %s393 = int_to_ptr.vmem [resolvable:$true] %s392
          %395 = dma.vmem_to_hbm [thread:$0]  %s393, 128, %s390, %s379
        $region48: #{tpu_custom_call.1} parent=31 // pred_fallthru
          _
        // Predicated region
        $region49: #{tpu_custom_call.1} parent=31 // pred_check
          %p396 = pneg %p137
        $region50: #{tpu_custom_call.1} parent=31 // pred_check_branch
          %398 = sbr.rel (%p396) target = $region52
        $region51: #{tpu_custom_call.1} parent=31 // pred_region
          %s400 = ssub.s32 16, 16
          %401 = vsyncadd [#allocation11], %s400
          %s403 = sshll.u32 [#allocation10], 4
          %s404 = int_to_ptr.vmem [resolvable:$true] %s403
          %406 = dma.vmem_to_hbm [thread:$0]  %s404, 16, %s5, [#allocation11]
        $region52: #{tpu_custom_call.1} parent=31 // pred_fallthru
          _
        // Predicated region
        $region53: #{tpu_custom_call.1} parent=31 // pred_check
          %p407 = pneg %p158
        $region54: #{tpu_custom_call.1} parent=31 // pred_check_branch
          %409 = sbr.rel (%p407) target = $region56
        $region55: #{tpu_custom_call.1} parent=31 // pred_region
          %s411 = ssub.s32 16, 16
          %412 = vsyncadd [#allocation11], %s411
          %s414 = sshll.u32 [#allocation12], 4
          %s415 = int_to_ptr.vmem [resolvable:$true] %s414
          %417 = dma.vmem_to_hbm [thread:$0]  %s415, 16, %s6, [#allocation11]
        $region56: #{tpu_custom_call.1} parent=31 // pred_fallthru
          _
        // Predicated region
        $region57: #{tpu_custom_call.1} parent=31 // pred_check
          %p418 = pneg %p137
        $region58: #{tpu_custom_call.1} parent=31 // pred_check_branch
          %420 = sbr.rel (%p418) target = $region60
        $region59: #{tpu_custom_call.1} parent=31 // pred_region
          %421 = dma.done [#allocation11], 16
        $region60: #{tpu_custom_call.1} parent=31 // pred_fallthru
          _
        // Predicated region
        $region61: #{tpu_custom_call.1} parent=31 // pred_check
          %p422 = pneg %p158
        $region62: #{tpu_custom_call.1} parent=31 // pred_check_branch
          %424 = sbr.rel (%p422) target = $region64
        $region63: #{tpu_custom_call.1} parent=31 // pred_region
          %425 = dma.done [#allocation11], 16
        $region64: #{tpu_custom_call.1} parent=31 // pred_fallthru
          _
      $region32: #{tpu_custom_call.1} parent=5 // pred_fallthru
        _
      %p426 = scmp.le.s32.totalorder 2, %s25
      // Predicated region
      $region65: #{tpu_custom_call.1} parent=5 // pred_check
        %p427 = pneg %p426
      $region66: #{tpu_custom_call.1} parent=5 // pred_check_branch
        %429 = sbr.rel (%p427) target = $region68
      $region67: #{tpu_custom_call.1} parent=5 // pred_region
        %s430 = ssub.s32 %s25, 2
        // Predicated region
        $region69: #{tpu_custom_call.1} parent=67 // pred_check
          %p431 = pneg %p122
        $region70: #{tpu_custom_call.1} parent=67 // pred_check_branch
          %433 = sbr.rel (%p431) target = $region72
        $region71: #{tpu_custom_call.1} parent=67 // pred_region
          %s434 = sand.u32 %s107, 1
          %s435 = scalar_lea.sflag [#allocation6], %s434
          %s436 = sand.u32 %s107, 1
          %s437 = smul.addr %s436, 8
          %s438 = scalar_lea.vmem [#allocation9], %s437
          %439 = dma.done %s435, 128
        $region72: #{tpu_custom_call.1} parent=67 // pred_fallthru
          _
      $region68: #{tpu_custom_call.1} parent=5 // pred_fallthru
        _
    $region6: #{tpu_custom_call.1} parent=1 // loop_footer
      %s29 = sadd.s32 1, %s25
    $region7: #{tpu_custom_call.1} parent=1 // loop_footer_branch
      %24 = sbr.rel target = $region3
    $region8: #{tpu_custom_call.1} parent=1 // loop_exit
      _
    %440 = vsyncpa [#allocation5], 1
    %s441 = scalar_lea.sflag [#allocation5], 1
    %442 = vsyncpa %s441, 1
    %443 = vsyncpa [#allocation8], 1
    %444 = vsyncpa [#allocation6], 1
    %s445 = scalar_lea.sflag [#allocation6], 1
    %446 = vsyncpa %s445, 1
    %447 = vsyncpa [#allocation11], 1

</llo_original>
